<compile_context>
chip_gen: v5e
topology: v5e:2x2
jax: 0.10.0
libtpu: 0.0.40
codegen_flags: <defaults>
</compile_context>

<pallas_src>
import functools

import jax
import jax.numpy as jnp
from jax import lax
from jax.experimental import pallas as pl
from jax.experimental.pallas import tpu as pltpu

LN_EPS = 1e-5
LANE = 128
SUBLANE = 16          # covers bf16 (16,128) and f32 (8,128) sublane tiling


def _round_up(v, m):
    return (v + m - 1) // m * m


# ---------------------------------------------------------------------------
# Kernel
# ---------------------------------------------------------------------------
def _encoder_kernel(x_ref, q_ref, w_in_ref, w_res_ref, w_out_ref, vecs_ref,
                    b_out_ref, o_ref, *, n_res_layers, norm, d_enc_real):
    # Streams (bf16 on the wire by default); all matmuls accumulate in f32.
    x = x_ref[...]
    q = q_ref[...].astype(jnp.float32)

    # Resident weights (constant index_map, single-buffered).
    w_in = w_in_ref[...]
    w_res = w_res_ref[...]
    w_out = w_out_ref[...]
    w_dtype = w_res.dtype

    # Packed per-feature vectors: rows 0..3 = b_in, b_res, ln_gamma, ln_beta.
    vecs = vecs_ref[...]
    b_in = vecs[0:1, :]
    b_res = vecs[1:2, :]
    gamma = vecs[2:3, :]
    beta = vecs[3:4, :]
    b_out = b_out_ref[...]

    inv_d = jnp.float32(1.0 / float(d_enc_real))

    # weight_in
    h = jnp.dot(x.astype(w_dtype), w_in,
                preferred_element_type=jnp.float32) + b_in

    # PADDING INVARIANT (load-bearing): padded feature lanes of h stay exactly
    # zero across layers because w_in/w_res/q/gamma/beta/b_* are zero-padded in
    # the wrapper.  Hence sum(r)/sum(r*r) over the padded width already equal
    # the sums over the real width and LN output stays zero in padded lanes.
    def res_block(hh):
        r = jnp.dot(hh.astype(w_dtype), w_res,
                    preferred_element_type=jnp.float32) + b_res
        if norm:
            # Single-pass mean / E[r^2] -> variance (padded lanes of r are 0).
            mean = jnp.sum(r, axis=-1, keepdims=True) * inv_d
            msq = jnp.sum(r * r, axis=-1, keepdims=True) * inv_d
            var = msq - mean * mean
            inv = lax.rsqrt(var + LN_EPS)
            r = (r - mean) * (inv * gamma) + beta
        r = jnp.maximum(r, 0.0)          # ReLU
        return (hh + r) * q              # residual add, then * q_embedding

    if n_res_layers <= 4:
        # The PyTorch ModuleList shares one block; a short static loop unrolls.
        for _ in range(n_res_layers):
            h = res_block(h)
    else:
        h = lax.fori_loop(0, n_res_layers, lambda _, hh: res_block(hh), h,
                          unroll=2)

    out = jnp.dot(h.astype(w_dtype), w_out,
                  preferred_element_type=jnp.float32) + b_out
    o_ref[...] = out.astype(o_ref.dtype)


# ---------------------------------------------------------------------------
# Wrapper
# ---------------------------------------------------------------------------
def _tpu_budget(row_tile):
    """(vmem_limit_bytes, row_tile, min_grid_steps) per TPU generation."""
    try:
        cap = int(pltpu.get_tpu_info().vmem_capacity_bytes)
    except Exception:
        cap = 64 * 1024 * 1024           # conservative fallback
    if cap >= 100 * 1024 * 1024:         # v5e / v6e: 128 MiB VMEM, 1 TC
        return 96 * 1024 * 1024, (row_tile or 1024), 1
    # v7x: 64 MiB VMEM, 2 TCs -> keep headroom, and >=2 grid steps so the
    # "parallel" row axis shards across both TensorCores.
    return 48 * 1024 * 1024, (row_tile or 512), 2


def encoder_forward(x, q_embedding, params, *, n_res_layers, norm=True,
                    row_tile=None, stream_dtype=jnp.bfloat16,
                    weight_dtype=jnp.bfloat16, out_dtype=None):
    """x: [..., in_dim]; q_embedding broadcastable to x.shape[:-1] + (d_enc,)."""
    lead = x.shape[:-1]
    in_dim = x.shape[-1]
    d_enc = params["w_in"].shape[1]
    d_out = params["w_out"].shape[1]
    out_dtype = x.dtype if out_dtype is None else out_dtype

    x2 = x.reshape(-1, in_dim).astype(stream_dtype)
    n = x2.shape[0]

    # q_embedding: stream a per-row q; keep a single broadcast row resident in
    # VMEM (never materialized in HBM); only materialize for partial broadcasts.
    q = jnp.asarray(q_embedding)
    q_lead = q.shape[:-1]
    if q_lead == lead:
        q2 = q.reshape(-1, d_enc).astype(stream_dtype)
        q_streamed = True
    elif all(s == 1 for s in q_lead):
        q2 = q.reshape(1, d_enc).astype(stream_dtype)
        q_streamed = False
    else:
        q2 = jnp.broadcast_to(q, lead + (d_enc,)).reshape(-1, d_enc)
        q2 = q2.astype(stream_dtype)
        q_streamed = True

    # Feature dims padded to 128 lanes (lane-dense loads, unmasked stores).
    in_p = _round_up(in_dim, LANE)
    enc_p = _round_up(d_enc, LANE)
    out_p = _round_up(d_out, LANE)

    vmem_limit, row_tile, min_steps = _tpu_budget(row_tile)

    # Balance the row tile across ceil(n / row_tile) steps: bounds row padding
    # to < SUBLANE rows and keeps >= min_steps grid steps for megacore.
    n_steps = max(pl.cdiv(n, row_tile), min_steps)
    tm = _round_up(pl.cdiv(n, n_steps), SUBLANE)
    n_p = _round_up(n, tm)
    grid = (n_p // tm,)

    def pad2(a, rows, cols, dtype):
        a = jnp.asarray(a, dtype)
        return jnp.pad(a, ((0, rows - a.shape[0]), (0, cols - a.shape[1])))

    # NOTE: zero padding everywhere is load-bearing (PADDING INVARIANT above).
    x_p = pad2(x2, n_p, in_p, stream_dtype)
    q_p = pad2(q2, n_p if q_streamed else 1, enc_p, stream_dtype)
    w_in_p = pad2(params["w_in"], in_p, enc_p, weight_dtype)
    w_res_p = pad2(params["w_res"], enc_p, enc_p, weight_dtype)
    w_out_p = pad2(params["w_out"], enc_p, out_p, weight_dtype)
    b_out_p = pad2(jnp.reshape(params["b_out"], (1, d_out)), 1, out_p,
                   jnp.float32)

    # Pack the four (1, d_enc) vectors into one resident (8, enc_p) operand.
    vecs = jnp.zeros((8, enc_p), jnp.float32)
    vecs = vecs.at[0, :d_enc].set(jnp.reshape(params["b_in"], (-1,)).astype(jnp.float32))
    vecs = vecs.at[1, :d_enc].set(jnp.reshape(params["b_res"], (-1,)).astype(jnp.float32))
    vecs = vecs.at[2, :d_enc].set(jnp.reshape(params["ln_gamma"], (-1,)).astype(jnp.float32))
    vecs = vecs.at[3, :d_enc].set(jnp.reshape(params["ln_beta"], (-1,)).astype(jnp.float32))

    kernel = functools.partial(_encoder_kernel, n_res_layers=n_res_layers,
                               norm=norm, d_enc_real=d_enc)

    def row_spec(cols):
        return pl.BlockSpec((tm, cols), lambda i: (i, 0))

    def const_spec(shape):
        idx = lambda i, _s=shape: (0,) * len(_s)
        try:   # single-buffer resident operands (halves their VMEM footprint)
            return pl.BlockSpec(shape, idx, pipeline_mode=pl.Buffered(1))
        except Exception:
            return pl.BlockSpec(shape, idx)

    q_spec = row_spec(enc_p) if q_streamed else const_spec((1, enc_p))

    out_padded = pl.pallas_call(
        kernel,
        out_shape=jax.ShapeDtypeStruct((n_p, out_p), out_dtype),
        grid=grid,
        in_specs=[
            row_spec(in_p),                 # x        (streamed, bf16)
            q_spec,                         # q        (streamed or resident)
            const_spec((in_p, enc_p)),      # w_in     (resident)
            const_spec((enc_p, enc_p)),     # w_res    (resident, shared block)
            const_spec((enc_p, out_p)),     # w_out    (resident)
            const_spec((8, enc_p)),         # packed b_in / b_res / gamma / beta
            const_spec((1, out_p)),         # b_out
        ],
        out_specs=row_spec(out_p),
        compiler_params=pltpu.CompilerParams(
            dimension_semantics=("parallel",),
            vmem_limit_bytes=vmem_limit,
        ),
    )(x_p, q_p, w_in_p, w_res_p, w_out_p, vecs, b_out_p)

    return out_padded[:n, :d_out].reshape(lead + (d_out,))


# ---------------------------------------------------------------------------
# Params + reference
# ---------------------------------------------------------------------------
def init_params(key, in_dim, dim_encoder, dim_encoder_out):
    ks = jax.random.split(key, 6)
    scale = 0.1
    return {
        # weights stored as (fan_in, fan_out) so the kernel computes x @ W
        "w_in":    jax.random.normal(ks[0], (in_dim, dim_encoder), jnp.float32) * scale,
        "b_in":    jax.random.normal(ks[1], (1, dim_encoder), jnp.float32) * scale,
        "w_res":   jax.random.normal(ks[2], (dim_encoder, dim_encoder), jnp.float32) * scale,
        "b_res":   jax.random.normal(ks[3], (1, dim_encoder), jnp.float32) * scale,
        "ln_gamma": jnp.ones((1, dim_encoder), jnp.float32),
        "ln_beta":  jnp.zeros((1, dim_encoder), jnp.float32),
        "w_out":   jax.random.normal(ks[4], (dim_encoder, dim_encoder_out), jnp.float32) * scale,
        "b_out":   jax.random.normal(ks[5], (1, dim_encoder_out), jnp.float32) * scale,
    }


def _reference(x, q, p, n_res_layers, norm=True, cast_dtype=None):
    """Pure-JAX reference mirroring the PyTorch forward.

    cast_dtype=None       -> exact f32 reference.
    cast_dtype=bfloat16   -> emulates the kernel's bf16 streams/weights (matmul
                             inputs and q quantized to bf16, f32 accumulation).
    """
    def cast(a):
        if cast_dtype is None:
            return a
        return a.astype(cast_dtype).astype(jnp.float32)

    def mm(a, w):
        return jnp.dot(cast(a), cast(w), preferred_element_type=jnp.float32)

    qq = cast(q)
    h = mm(x, p["w_in"]) + p["b_in"]
    for _ in range(n_res_layers):
        r = mm(h, p["w_res"]) + p["b_res"]
        if norm:
            mean = r.mean(-1, keepdims=True)
            var = ((r - mean) ** 2).mean(-1, keepdims=True)
            r = (r - mean) / jnp.sqrt(var + LN_EPS)
            r = r * p["ln_gamma"] + p["ln_beta"]
        r = jnp.maximum(r, 0.0)
        h = (h + r) * qq
    return mm(h, p["w_out"]) + p["b_out"]


if __name__ == "__main__":
    # small shapes consistent with the module
    batch, seq = 2, 8
    in_dim, dim_encoder, dim_encoder_out = 16, 32, 16
    n_res_layers = 2

    key = jax.random.PRNGKey(0)
    k_x, k_q, k_p = jax.random.split(key, 3)

    x = jax.random.normal(k_x, (batch, seq, in_dim), jnp.float32)
    q_full = jax.random.normal(k_q, (batch, seq, dim_encoder), jnp.float32)
    params = init_params(k_p, in_dim, dim_encoder, dim_encoder_out)

    # 1) per-row q_embedding (streamed path)
    out = encoder_forward(x, q_full, params, n_res_layers=n_res_layers, norm=True)
    out = jax.block_until_ready(out)
    assert out.shape == (batch, seq, dim_encoder_out)

    ref_match = _reference(x.reshape(-1, in_dim), q_full.reshape(-1, dim_encoder),
                           params, n_res_layers,
                           cast_dtype=jnp.bfloat16).reshape(batch, seq, dim_encoder_out)
    ref_f32 = _reference(x.reshape(-1, in_dim), q_full.reshape(-1, dim_encoder),
                         params, n_res_layers).reshape(batch, seq, dim_encoder_out)
    assert jnp.allclose(out.astype(jnp.float32), ref_match, atol=3e-3, rtol=3e-3)
    assert jnp.allclose(out.astype(jnp.float32), ref_f32, atol=1e-1, rtol=1e-1)

    # 2) broadcastable q_embedding (kept resident in VMEM, never materialized)
    q_small = jax.random.normal(k_q, (1, 1, dim_encoder), jnp.float32)
    out2 = encoder_forward(x, q_small, params, n_res_layers=n_res_layers, norm=True)
    out2 = jax.block_until_ready(out2)
    ref2 = _reference(x.reshape(-1, in_dim), q_small.reshape(1, dim_encoder),
                      params, n_res_layers,
                      cast_dtype=jnp.bfloat16).reshape(batch, seq, dim_encoder_out)
    assert out2.shape == (batch, seq, dim_encoder_out)
    assert jnp.allclose(out2.astype(jnp.float32), ref2, atol=3e-3, rtol=3e-3)

    print("KERNEL_OK")
</pallas_src>

<mosaic_0001>
module attributes {stable_mosaic.version = 11 : i64} {
  func.func @_encoder_kernel(%arg0: i32, %arg1: memref<16x128xbf16, #tpu.memory_space<vmem>>, %arg2: memref<16x128xbf16, #tpu.memory_space<vmem>>, %arg3: memref<128x128xbf16, #tpu.memory_space<vmem>>, %arg4: memref<128x128xbf16, #tpu.memory_space<vmem>>, %arg5: memref<128x128xbf16, #tpu.memory_space<vmem>>, %arg6: memref<8x128xf32, #tpu.memory_space<vmem>>, %arg7: memref<1x128xf32, #tpu.memory_space<vmem>>, %arg8: memref<16x128xf32, #tpu.memory_space<vmem>>) attributes {dimension_semantics = [#tpu.dimension_semantics<parallel>], iteration_bounds = array<i64: 1>, scalar_prefetch = 0 : i64, scratch_operands = 0 : i64, tpu.core_type = #tpu.core_type<tc>, window_params = [{transform_indices = @transform_0, window_bounds = array<i64: 16, 128>}, {transform_indices = @transform_1, window_bounds = array<i64: 16, 128>}, {pipeline_mode = #tpu.pipeline_mode<synchronous>, transform_indices = @transform_2, window_bounds = array<i64: 128, 128>}, {pipeline_mode = #tpu.pipeline_mode<synchronous>, transform_indices = @transform_3, window_bounds = array<i64: 128, 128>}, {pipeline_mode = #tpu.pipeline_mode<synchronous>, transform_indices = @transform_4, window_bounds = array<i64: 128, 128>}, {pipeline_mode = #tpu.pipeline_mode<synchronous>, transform_indices = @transform_5, window_bounds = array<i64: 8, 128>}, {pipeline_mode = #tpu.pipeline_mode<synchronous>, transform_indices = @transform_6, window_bounds = array<i64: 1, 128>}, {transform_indices = @transform_7, window_bounds = array<i64: 16, 128>}]} {
    %c0 = arith.constant 0 : index
    %c0_0 = arith.constant 0 : index
    %0 = vector.load %arg1[%c0, %c0_0] : memref<16x128xbf16, #tpu.memory_space<vmem>>, vector<16x128xbf16>
    %c0_1 = arith.constant 0 : index
    %c0_2 = arith.constant 0 : index
    %1 = vector.load %arg2[%c0_1, %c0_2] : memref<16x128xbf16, #tpu.memory_space<vmem>>, vector<16x128xbf16>
    %2 = arith.extf %1 : vector<16x128xbf16> to vector<16x128xf32>
    %c0_3 = arith.constant 0 : index
    %c0_4 = arith.constant 0 : index
    %3 = vector.load %arg3[%c0_3, %c0_4] : memref<128x128xbf16, #tpu.memory_space<vmem>>, vector<128x128xbf16>
    %c0_5 = arith.constant 0 : index
    %c0_6 = arith.constant 0 : index
    %4 = vector.load %arg4[%c0_5, %c0_6] : memref<128x128xbf16, #tpu.memory_space<vmem>>, vector<128x128xbf16>
    %c0_7 = arith.constant 0 : index
    %c0_8 = arith.constant 0 : index
    %5 = vector.load %arg5[%c0_7, %c0_8] : memref<128x128xbf16, #tpu.memory_space<vmem>>, vector<128x128xbf16>
    %c0_9 = arith.constant 0 : index
    %c0_10 = arith.constant 0 : index
    %6 = vector.load %arg6[%c0_9, %c0_10] : memref<8x128xf32, #tpu.memory_space<vmem>>, vector<8x128xf32>
    %7 = vector.extract_strided_slice %6 {offsets = [0, 0], sizes = [1, 128], strides = [1, 1]} : vector<8x128xf32> to vector<1x128xf32>
    %8 = vector.extract_strided_slice %6 {offsets = [1, 0], sizes = [1, 128], strides = [1, 1]} : vector<8x128xf32> to vector<1x128xf32>
    %9 = vector.extract_strided_slice %6 {offsets = [2, 0], sizes = [1, 128], strides = [1, 1]} : vector<8x128xf32> to vector<1x128xf32>
    %10 = vector.extract_strided_slice %6 {offsets = [3, 0], sizes = [1, 128], strides = [1, 1]} : vector<8x128xf32> to vector<1x128xf32>
    %c0_11 = arith.constant 0 : index
    %c0_12 = arith.constant 0 : index
    %11 = vector.load %arg7[%c0_11, %c0_12] : memref<1x128xf32, #tpu.memory_space<vmem>>, vector<1x128xf32>
    %cst = arith.constant dense<0.000000e+00> : vector<16x128xf32>
    %12 = tpu.matmul %0, %3, %cst {dimension_numbers = #tpu.dot_dimension_numbers<[1], [0], [0], [1], [0, 0, 1, 1], [], []>} : vector<16x128xbf16>, vector<128x128xbf16>, vector<16x128xf32> -> vector<16x128xf32>
    %13 = vector.broadcast %7 : vector<1x128xf32> to vector<16x128xf32>
    %14 = arith.addf %12, %13 : vector<16x128xf32>
    %15 = arith.truncf %14 : vector<16x128xf32> to vector<16x128xbf16>
    %cst_13 = arith.constant dense<0.000000e+00> : vector<16x128xf32>
    %16 = tpu.matmul %15, %4, %cst_13 {dimension_numbers = #tpu.dot_dimension_numbers<[1], [0], [0], [1], [0, 0, 1, 1], [], []>} : vector<16x128xbf16>, vector<128x128xbf16>, vector<16x128xf32> -> vector<16x128xf32>
    %17 = vector.broadcast %8 : vector<1x128xf32> to vector<16x128xf32>
    %18 = arith.addf %16, %17 : vector<16x128xf32>
    %cst_14 = arith.constant dense<0.000000e+00> : vector<16xf32>
    %19 = vector.multi_reduction <add>, %18, %cst_14 [1] : vector<16x128xf32> to vector<16xf32>
    %20 = vector.shape_cast %19 : vector<16xf32> to vector<16x1xf32>
    %cst_15 = arith.constant 3.125000e-02 : f32
    %21 = vector.broadcast %cst_15 : f32 to vector<16x1xf32>
    %22 = arith.mulf %20, %21 : vector<16x1xf32>
    %23 = arith.mulf %18, %18 : vector<16x128xf32>
    %cst_16 = arith.constant dense<0.000000e+00> : vector<16xf32>
    %24 = vector.multi_reduction <add>, %23, %cst_16 [1] : vector<16x128xf32> to vector<16xf32>
    %25 = vector.shape_cast %24 : vector<16xf32> to vector<16x1xf32>
    %cst_17 = arith.constant 3.125000e-02 : f32
    %26 = vector.broadcast %cst_17 : f32 to vector<16x1xf32>
    %27 = arith.mulf %25, %26 : vector<16x1xf32>
    %28 = arith.mulf %22, %22 : vector<16x1xf32>
    %29 = arith.subf %27, %28 : vector<16x1xf32>
    %cst_18 = arith.constant 9.99999974E-6 : f32
    %30 = vector.broadcast %cst_18 : f32 to vector<16x1xf32>
    %31 = arith.addf %29, %30 : vector<16x1xf32>
    %32 = math.rsqrt %31 : vector<16x1xf32>
    %33 = vector.broadcast %22 : vector<16x1xf32> to vector<16x128xf32>
    %34 = arith.subf %18, %33 : vector<16x128xf32>
    %35 = vector.broadcast %32 : vector<16x1xf32> to vector<16x128xf32>
    %36 = vector.broadcast %9 : vector<1x128xf32> to vector<16x128xf32>
    %37 = arith.mulf %35, %36 : vector<16x128xf32>
    %38 = arith.mulf %34, %37 : vector<16x128xf32>
    %39 = vector.broadcast %10 : vector<1x128xf32> to vector<16x128xf32>
    %40 = arith.addf %38, %39 : vector<16x128xf32>
    %cst_19 = arith.constant 0.000000e+00 : f32
    %41 = vector.broadcast %cst_19 : f32 to vector<16x128xf32>
    %42 = arith.maximumf %40, %41 : vector<16x128xf32>
    %43 = arith.addf %14, %42 : vector<16x128xf32>
    %44 = arith.mulf %43, %2 : vector<16x128xf32>
    %45 = arith.truncf %44 : vector<16x128xf32> to vector<16x128xbf16>
    %cst_20 = arith.constant dense<0.000000e+00> : vector<16x128xf32>
    %46 = tpu.matmul %45, %4, %cst_20 {dimension_numbers = #tpu.dot_dimension_numbers<[1], [0], [0], [1], [0, 0, 1, 1], [], []>} : vector<16x128xbf16>, vector<128x128xbf16>, vector<16x128xf32> -> vector<16x128xf32>
    %47 = vector.broadcast %8 : vector<1x128xf32> to vector<16x128xf32>
    %48 = arith.addf %46, %47 : vector<16x128xf32>
    %cst_21 = arith.constant dense<0.000000e+00> : vector<16xf32>
    %49 = vector.multi_reduction <add>, %48, %cst_21 [1] : vector<16x128xf32> to vector<16xf32>
    %50 = vector.shape_cast %49 : vector<16xf32> to vector<16x1xf32>
    %cst_22 = arith.constant 3.125000e-02 : f32
    %51 = vector.broadcast %cst_22 : f32 to vector<16x1xf32>
    %52 = arith.mulf %50, %51 : vector<16x1xf32>
    %53 = arith.mulf %48, %48 : vector<16x128xf32>
    %cst_23 = arith.constant dense<0.000000e+00> : vector<16xf32>
    %54 = vector.multi_reduction <add>, %53, %cst_23 [1] : vector<16x128xf32> to vector<16xf32>
    %55 = vector.shape_cast %54 : vector<16xf32> to vector<16x1xf32>
    %cst_24 = arith.constant 3.125000e-02 : f32
    %56 = vector.broadcast %cst_24 : f32 to vector<16x1xf32>
    %57 = arith.mulf %55, %56 : vector<16x1xf32>
    %58 = arith.mulf %52, %52 : vector<16x1xf32>
    %59 = arith.subf %57, %58 : vector<16x1xf32>
    %cst_25 = arith.constant 9.99999974E-6 : f32
    %60 = vector.broadcast %cst_25 : f32 to vector<16x1xf32>
    %61 = arith.addf %59, %60 : vector<16x1xf32>
    %62 = math.rsqrt %61 : vector<16x1xf32>
    %63 = vector.broadcast %52 : vector<16x1xf32> to vector<16x128xf32>
    %64 = arith.subf %48, %63 : vector<16x128xf32>
    %65 = vector.broadcast %62 : vector<16x1xf32> to vector<16x128xf32>
    %66 = vector.broadcast %9 : vector<1x128xf32> to vector<16x128xf32>
    %67 = arith.mulf %65, %66 : vector<16x128xf32>
    %68 = arith.mulf %64, %67 : vector<16x128xf32>
    %69 = vector.broadcast %10 : vector<1x128xf32> to vector<16x128xf32>
    %70 = arith.addf %68, %69 : vector<16x128xf32>
    %cst_26 = arith.constant 0.000000e+00 : f32
    %71 = vector.broadcast %cst_26 : f32 to vector<16x128xf32>
    %72 = arith.maximumf %70, %71 : vector<16x128xf32>
    %73 = arith.addf %44, %72 : vector<16x128xf32>
    %74 = arith.mulf %73, %2 : vector<16x128xf32>
    %75 = arith.truncf %74 : vector<16x128xf32> to vector<16x128xbf16>
    %cst_27 = arith.constant dense<0.000000e+00> : vector<16x128xf32>
    %76 = tpu.matmul %75, %5, %cst_27 {dimension_numbers = #tpu.dot_dimension_numbers<[1], [0], [0], [1], [0, 0, 1, 1], [], []>} : vector<16x128xbf16>, vector<128x128xbf16>, vector<16x128xf32> -> vector<16x128xf32>
    %77 = vector.broadcast %11 : vector<1x128xf32> to vector<16x128xf32>
    %78 = arith.addf %76, %77 : vector<16x128xf32>
    %c0_28 = arith.constant 0 : index
    %c0_29 = arith.constant 0 : index
    %79 = vector.load %arg8[%c0_28, %c0_29] : memref<16x128xf32, #tpu.memory_space<vmem>>, vector<16x128xf32>
    tpu.vector_store %arg8[%c0_28, %c0_29], %78 {strides = array<i32>} : memref<16x128xf32, #tpu.memory_space<vmem>>, vector<16x128xf32>,
    return
  }
  func.func @transform_0(%arg0: i32) -> (i32, i32) {
    %c0_i32 = arith.constant 0 : i32
    %c0_i32_0 = arith.constant 0 : i32
    return %arg0, %c0_i32 : i32, i32
  }
  func.func @transform_1(%arg0: i32) -> (i32, i32) {
    %c0_i32 = arith.constant 0 : i32
    %c0_i32_0 = arith.constant 0 : i32
    return %arg0, %c0_i32 : i32, i32
  }
  func.func @transform_2(%arg0: i32) -> (i32, i32) {
    %c0_i32 = arith.constant 0 : i32
    %c0_i32_0 = arith.constant 0 : i32
    %c0_i32_1 = arith.constant 0 : i32
    return %c0_i32, %c0_i32_0 : i32, i32
  }
  func.func @transform_3(%arg0: i32) -> (i32, i32) {
    %c0_i32 = arith.constant 0 : i32
    %c0_i32_0 = arith.constant 0 : i32
    %c0_i32_1 = arith.constant 0 : i32
    return %c0_i32, %c0_i32_0 : i32, i32
  }
  func.func @transform_4(%arg0: i32) -> (i32, i32) {
    %c0_i32 = arith.constant 0 : i32
    %c0_i32_0 = arith.constant 0 : i32
    %c0_i32_1 = arith.constant 0 : i32
    return %c0_i32, %c0_i32_0 : i32, i32
  }
  func.func @transform_5(%arg0: i32) -> (i32, i32) {
    %c0_i32 = arith.constant 0 : i32
    %c0_i32_0 = arith.constant 0 : i32
    %c0_i32_1 = arith.constant 0 : i32
    return %c0_i32, %c0_i32_0 : i32, i32
  }
  func.func @transform_6(%arg0: i32) -> (i32, i32) {
    %c0_i32 = arith.constant 0 : i32
    %c0_i32_0 = arith.constant 0 : i32
    %c0_i32_1 = arith.constant 0 : i32
    return %c0_i32, %c0_i32_0 : i32, i32
  }
  func.func @transform_7(%arg0: i32) -> (i32, i32) {
    %c0_i32 = arith.constant 0 : i32
    %c0_i32_0 = arith.constant 0 : i32
    return %arg0, %c0_i32 : i32, i32
  }
}

</mosaic_0001>

<llo_original>
// kernel: tpu_custom_call.1
$region0: #{tpu_custom_call.1}
  #allocation0 [shape = 'u32[]', space=smem, size = 0x4, offset = 0x4, fixed_abs, tag = 'smem constant byte address 0x4 - core index']
  #allocation1 [shape = 'u32[72,128]{1,0:T(1,128)}', space=vmem, size = 0x9000, scoped, tag = 'internal scratch']
  %s0 = inlined_call_operand.hbm [shape: bf16[16,128], index: 0, kind: input, shape index: {}]
  %s1 = inlined_call_operand.hbm [shape: bf16[16,128], index: 1, kind: input, shape index: {}]
  %s2 = inlined_call_operand.hbm [shape: bf16[128,128], index: 2, kind: input, shape index: {}]
  %s3 = inlined_call_operand.hbm [shape: bf16[128,128], index: 3, kind: input, shape index: {}]
  %s4 = inlined_call_operand.hbm [shape: bf16[128,128], index: 4, kind: input, shape index: {}]
  %s5 = inlined_call_operand.hbm [shape: f32[8,128], index: 5, kind: input, shape index: {}]
  %s6 = inlined_call_operand.vmem [shape: f32[1,128], index: 6, kind: input, shape index: {}]
  %s7 = inlined_call_operand.hbm [shape: f32[16,128], index: 7, kind: output, shape index: {}]
  %s8 = sld [smem:[#allocation0]]
  $region62: #{tpu_custom_call.1} parent=0
    _
  %s10 = ssub.s32 1, %s8
  %s11 = scalar_select 0, %s10, %s8
  $region1: #{tpu_custom_call.1} parent=0
    #allocation2 [shape = 'u8[4096]{0}', space=vmem, size = 0x1000, scoped, tag = 'input window, operand 0, single buffered']
    #allocation3 [shape = 's32[1]{0}', space=sflag, size = 0x4, scoped, tag = 'scoped memory for tpu_custom_call.1']
    #allocation4 [shape = 's32[1]{0}', space=sflag, size = 0x4, scoped, tag = 'scoped memory for tpu_custom_call.1']
    #allocation5 [shape = 'u8[4096]{0}', space=vmem, size = 0x1000, scoped, tag = 'input window, operand 1, single buffered']
    #allocation6 [shape = 's32[1]{0}', space=sflag, size = 0x4, scoped, tag = 'scoped memory for tpu_custom_call.1']
    #allocation7 [shape = 'u8[32768]{0}', space=vmem, size = 0x8000, scoped, tag = 'input window, operand 2, single buffered']
    #allocation8 [shape = 'u8[32768]{0}', space=vmem, size = 0x8000, scoped, tag = 'input window, operand 3, single buffered']
    #allocation9 [shape = 's32[1]{0}', space=sflag, size = 0x4, scoped, tag = 'scoped memory for tpu_custom_call.1']
    #allocation10 [shape = 'u8[32768]{0}', space=vmem, size = 0x8000, scoped, tag = 'input window, operand 4, single buffered']
    #allocation11 [shape = 'u8[4096]{0}', space=vmem, size = 0x1000, scoped, tag = 'input window, operand 5, single buffered']
    #allocation12 [shape = 's32[1]{0}', space=sflag, size = 0x4, scoped, tag = 'scoped memory for tpu_custom_call.1']
    #allocation13 [shape = 'u8[8192]{0}', space=vmem, size = 0x2000, scoped, tag = 'output window, operand 0, single buffered']
    %12 = vsyncpa [#allocation3], 0
    %13 = vsyncpa [#allocation6], 0
    %14 = vsyncpa [#allocation9], 0
    %15 = vsyncpa [#allocation12], 0
    %16 = vsyncpa [#allocation4], 0
    // Predicated region
    $region2: #{tpu_custom_call.1} parent=1 // pred_check
      _
    $region3: #{tpu_custom_call.1} parent=1 // pred_check_branch
      %18 = sbr.rel (0) target = $region5
    $region4: #{tpu_custom_call.1} parent=1 // pred_region
      %20 = vsyncadd [#allocation3], 0
      %s21 = sshll.u32 %s0, 4
      %s22 = int_to_ptr.hbm [resolvable:$true] %s21
      %s23 = sshll.u32 [#allocation2], 4
      %s24 = int_to_ptr.vmem [resolvable:$true] %s23
      %29 = dma.hbm_to_vmem [thread:$0]  %s22, 128, %s24, [#allocation3], 64, 64, 4
    $region5: #{tpu_custom_call.1} parent=1 // pred_fallthru
      _
    // Predicated region
    $region6: #{tpu_custom_call.1} parent=1 // pred_check
      _
    $region7: #{tpu_custom_call.1} parent=1 // pred_check_branch
      %31 = sbr.rel (0) target = $region9
    $region8: #{tpu_custom_call.1} parent=1 // pred_region
      %33 = vsyncadd [#allocation6], 0
      %s34 = sshll.u32 %s1, 4
      %s35 = int_to_ptr.hbm [resolvable:$true] %s34
      %s36 = sshll.u32 [#allocation5], 4
      %s37 = int_to_ptr.vmem [resolvable:$true] %s36
      %42 = dma.hbm_to_vmem [thread:$0]  %s35, 128, %s37, [#allocation6], 64, 64, 4
    $region9: #{tpu_custom_call.1} parent=1 // pred_fallthru
      _
    // Predicated region
    $region10: #{tpu_custom_call.1} parent=1 // pred_check
      _
    $region11: #{tpu_custom_call.1} parent=1 // pred_check_branch
      %44 = sbr.rel (0) target = $region13
    $region12: #{tpu_custom_call.1} parent=1 // pred_region
      %46 = vsyncadd [#allocation6], 0
      %s47 = sshll.u32 %s2, 4
      %s48 = int_to_ptr.hbm [resolvable:$true] %s47
      %s49 = sshll.u32 [#allocation7], 4
      %s50 = int_to_ptr.vmem [resolvable:$true] %s49
      %55 = dma.hbm_to_vmem [thread:$0]  %s48, 1024, %s50, [#allocation6], 64, 64, 4
    $region13: #{tpu_custom_call.1} parent=1 // pred_fallthru
      _
    // Predicated region
    $region14: #{tpu_custom_call.1} parent=1 // pred_check
      _
    $region15: #{tpu_custom_call.1} parent=1 // pred_check_branch
      %57 = sbr.rel (0) target = $region17
    $region16: #{tpu_custom_call.1} parent=1 // pred_region
      %59 = vsyncadd [#allocation9], 0
      %s60 = sshll.u32 %s3, 4
      %s61 = int_to_ptr.hbm [resolvable:$true] %s60
      %s62 = sshll.u32 [#allocation8], 4
      %s63 = int_to_ptr.vmem [resolvable:$true] %s62
      %68 = dma.hbm_to_vmem [thread:$0]  %s61, 1024, %s63, [#allocation9], 64, 64, 4
    $region17: #{tpu_custom_call.1} parent=1 // pred_fallthru
      _
    // Predicated region
    $region18: #{tpu_custom_call.1} parent=1 // pred_check
      _
    $region19: #{tpu_custom_call.1} parent=1 // pred_check_branch
      %70 = sbr.rel (0) target = $region21
    $region20: #{tpu_custom_call.1} parent=1 // pred_region
      %72 = vsyncadd [#allocation9], 0
      %s73 = sshll.u32 %s4, 4
      %s74 = int_to_ptr.hbm [resolvable:$true] %s73
      %s75 = sshll.u32 [#allocation10], 4
      %s76 = int_to_ptr.vmem [resolvable:$true] %s75
      %81 = dma.hbm_to_vmem [thread:$0]  %s74, 1024, %s76, [#allocation9], 64, 64, 4
    $region21: #{tpu_custom_call.1} parent=1 // pred_fallthru
      _
    // Predicated region
    $region22: #{tpu_custom_call.1} parent=1 // pred_check
      _
    $region23: #{tpu_custom_call.1} parent=1 // pred_check_branch
      %83 = sbr.rel (0) target = $region25
    $region24: #{tpu_custom_call.1} parent=1 // pred_region
      %85 = vsyncadd [#allocation12], 0
      %s87 = sshll.u32 %s5, 4
      %s88 = int_to_ptr.hbm [resolvable:$true] %s87
      %s89 = sshll.u32 [#allocation11], 4
      %s90 = int_to_ptr.vmem [resolvable:$true] %s89
      %92 = dma.hbm_to_vmem [thread:$0]  %s88, 128, %s90, [#allocation12]
    $region25: #{tpu_custom_call.1} parent=1 // pred_fallthru
      _
    // Predicated region
    $region26: #{tpu_custom_call.1} parent=1 // pred_check
      _
    $region27: #{tpu_custom_call.1} parent=1 // pred_check_branch
      %94 = sbr.rel (0) target = $region29
    $region28: #{tpu_custom_call.1} parent=1 // pred_region
      _
    $region29: #{tpu_custom_call.1} parent=1 // pred_fallthru
      _
    // Predicated region
    $region30: #{tpu_custom_call.1} parent=1 // pred_check
      _
    $region31: #{tpu_custom_call.1} parent=1 // pred_check_branch
      %96 = sbr.rel (0) target = $region33
    $region32: #{tpu_custom_call.1} parent=1 // pred_region
      %98 = dma.done [#allocation3], 128
    $region33: #{tpu_custom_call.1} parent=1 // pred_fallthru
      _
    // Predicated region
    $region34: #{tpu_custom_call.1} parent=1 // pred_check
      _
    $region35: #{tpu_custom_call.1} parent=1 // pred_check_branch
      %100 = sbr.rel (0) target = $region37
    $region36: #{tpu_custom_call.1} parent=1 // pred_region
      %102 = dma.done [#allocation6], 128
    $region37: #{tpu_custom_call.1} parent=1 // pred_fallthru
      _
    // Predicated region
    $region38: #{tpu_custom_call.1} parent=1 // pred_check
      _
    $region39: #{tpu_custom_call.1} parent=1 // pred_check_branch
      %104 = sbr.rel (0) target = $region41
    $region40: #{tpu_custom_call.1} parent=1 // pred_region
      %106 = dma.done [#allocation6], 1024
    $region41: #{tpu_custom_call.1} parent=1 // pred_fallthru
      _
    // Predicated region
    $region42: #{tpu_custom_call.1} parent=1 // pred_check
      _
    $region43: #{tpu_custom_call.1} parent=1 // pred_check_branch
      %108 = sbr.rel (0) target = $region45
    $region44: #{tpu_custom_call.1} parent=1 // pred_region
      %110 = dma.done [#allocation9], 1024
    $region45: #{tpu_custom_call.1} parent=1 // pred_fallthru
      _
    // Predicated region
    $region46: #{tpu_custom_call.1} parent=1 // pred_check
      _
    $region47: #{tpu_custom_call.1} parent=1 // pred_check_branch
      %112 = sbr.rel (0) target = $region49
    $region48: #{tpu_custom_call.1} parent=1 // pred_region
      %114 = dma.done [#allocation9], 1024
    $region49: #{tpu_custom_call.1} parent=1 // pred_fallthru
      _
    // Predicated region
    $region50: #{tpu_custom_call.1} parent=1 // pred_check
      _
    $region51: #{tpu_custom_call.1} parent=1 // pred_check_branch
      %116 = sbr.rel (0) target = $region53
    $region52: #{tpu_custom_call.1} parent=1 // pred_region
      %118 = dma.done [#allocation12], 128
    $region53: #{tpu_custom_call.1} parent=1 // pred_fallthru
      _
    %v119 = vld [vmem:[#allocation2] sm:$0xf]
    %v120 = vld [vmem:[#allocation2 + $0x4] sm:$0xf]
    %v121 = vld [vmem:[#allocation5] sm:$0xf]
    %v122 = vld [vmem:[#allocation5 + $0x4] sm:$0xf]
    %v123 = vunpack.c.l.bf16 %v121
    %v124 = vunpack.c.l.bf16 %v122
    %v125 = vld [vmem:[#allocation7] sm:$0xf]
    %v126 = vld [vmem:[#allocation7 + $0x4] sm:$0xf]
    %v127 = vld [vmem:[#allocation7 + $0x8] sm:$0xf]
    %v128 = vld [vmem:[#allocation7 + $0xc] sm:$0xf]
    %v129 = vld [vmem:[#allocation7 + $0x10] sm:$0xf]
    %v130 = vld [vmem:[#allocation7 + $0x14] sm:$0xf]
    %v131 = vld [vmem:[#allocation7 + $0x18] sm:$0xf]
    %v132 = vld [vmem:[#allocation7 + $0x1c] sm:$0xf]
    %v133 = vld [vmem:[#allocation7 + $0x20] sm:$0xf]
    %v134 = vld [vmem:[#allocation7 + $0x24] sm:$0xf]
    %v135 = vld [vmem:[#allocation7 + $0x28] sm:$0xf]
    %v136 = vld [vmem:[#allocation7 + $0x2c] sm:$0xf]
    %v137 = vld [vmem:[#allocation7 + $0x30] sm:$0xf]
    %v138 = vld [vmem:[#allocation7 + $0x34] sm:$0xf]
    %v139 = vld [vmem:[#allocation7 + $0x38] sm:$0xf]
    %v140 = vld [vmem:[#allocation7 + $0x3c] sm:$0xf]
    %v141 = vld [vmem:[#allocation8] sm:$0xf]
    %v142 = vld [vmem:[#allocation8 + $0x4] sm:$0xf]
    %v143 = vld [vmem:[#allocation8 + $0x8] sm:$0xf]
    %v144 = vld [vmem:[#allocation8 + $0xc] sm:$0xf]
    %v145 = vld [vmem:[#allocation8 + $0x10] sm:$0xf]
    %v146 = vld [vmem:[#allocation8 + $0x14] sm:$0xf]
    %v147 = vld [vmem:[#allocation8 + $0x18] sm:$0xf]
    %v148 = vld [vmem:[#allocation8 + $0x1c] sm:$0xf]
    %v149 = vld [vmem:[#allocation8 + $0x20] sm:$0xf]
    %v150 = vld [vmem:[#allocation8 + $0x24] sm:$0xf]
    %v151 = vld [vmem:[#allocation8 + $0x28] sm:$0xf]
    %v152 = vld [vmem:[#allocation8 + $0x2c] sm:$0xf]
    %v153 = vld [vmem:[#allocation8 + $0x30] sm:$0xf]
    %v154 = vld [vmem:[#allocation8 + $0x34] sm:$0xf]
    %v155 = vld [vmem:[#allocation8 + $0x38] sm:$0xf]
    %v156 = vld [vmem:[#allocation8 + $0x3c] sm:$0xf]
    %v157 = vld [vmem:[#allocation10] sm:$0xf]
    %v158 = vld [vmem:[#allocation10 + $0x4] sm:$0xf]
    %v159 = vld [vmem:[#allocation10 + $0x8] sm:$0xf]
    %v160 = vld [vmem:[#allocation10 + $0xc] sm:$0xf]
    %v161 = vld [vmem:[#allocation10 + $0x10] sm:$0xf]
    %v162 = vld [vmem:[#allocation10 + $0x14] sm:$0xf]
    %v163 = vld [vmem:[#allocation10 + $0x18] sm:$0xf]
    %v164 = vld [vmem:[#allocation10 + $0x1c] sm:$0xf]
    %v165 = vld [vmem:[#allocation10 + $0x20] sm:$0xf]
    %v166 = vld [vmem:[#allocation10 + $0x24] sm:$0xf]
    %v167 = vld [vmem:[#allocation10 + $0x28] sm:$0xf]
    %v168 = vld [vmem:[#allocation10 + $0x2c] sm:$0xf]
    %v169 = vld [vmem:[#allocation10 + $0x30] sm:$0xf]
    %v170 = vld [vmem:[#allocation10 + $0x34] sm:$0xf]
    %v171 = vld [vmem:[#allocation10 + $0x38] sm:$0xf]
    %v172 = vld [vmem:[#allocation10 + $0x3c] sm:$0xf]
    %v173 = vld [vmem:[#allocation11] sm:$0xff]
    %v174 = vld [vmem:[%s6] sm:$0x1]
    %v175 = vperm.slane %v173, 0
    %v178 = vunpack.c.l.b16 %v119
    %v179 = vunpack.c.l.b16 %v120
    %v180 = vpack.c.b16 %v179, %v178
    %v198 = vunpack.c.l.b16 %v125
    %v199 = vunpack.c.l.b16 %v126
    %v200 = vunpack.c.l.b16 %v127
    %v201 = vunpack.c.l.b16 %v128
    %v202 = vunpack.c.l.b16 %v129
    %v203 = vunpack.c.l.b16 %v130
    %v204 = vunpack.c.l.b16 %v131
    %v205 = vunpack.c.l.b16 %v132
    %v206 = vunpack.c.l.b16 %v133
    %v207 = vunpack.c.l.b16 %v134
    %v208 = vunpack.c.l.b16 %v135
    %v209 = vunpack.c.l.b16 %v136
    %v210 = vunpack.c.l.b16 %v137
    %v211 = vunpack.c.l.b16 %v138
    %v212 = vunpack.c.l.b16 %v139
    %v213 = vunpack.c.l.b16 %v140
    %v214 = vpack.c.b16 %v199, %v198
    %v215 = vpack.c.b16 %v201, %v200
    %v216 = vpack.c.b16 %v203, %v202
    %v217 = vpack.c.b16 %v205, %v204
    %v218 = vpack.c.b16 %v207, %v206
    %v219 = vpack.c.b16 %v209, %v208
    %v220 = vpack.c.b16 %v211, %v210
    %v221 = vpack.c.b16 %v213, %v212
    %230 = vmatpush.bf16.msra.mxu0 %v221
    %231 = vmatpush.bf16.msra.mxu0 %v220
    %232 = vmatpush.bf16.msra.mxu0 %v219
    %233 = vmatpush.bf16.msra.mxu0 %v218
    %234 = vmatpush.bf16.msra.mxu0 %v217
    %235 = vmatpush.bf16.msra.mxu0 %v216
    %236 = vmatpush.bf16.msra.mxu0 %v215
    %237 = vmatpush.bf16.msra.mxu0 %v214
    %238 = vmatmul.bf16.gmra.mxu0 %v180
    %v239 = vpop.f32.mrf.mxu0
    %v240 = vadd.f32 %v175, %v239
    %v241 = vpop.f32.mrf.mxu0
    %v242 = vadd.f32 %v175, %v241
    %243 = vdwg.mxu0
    %v244 = vpack.c.bf16 %v242, %v240
    %v245 = vperm.slane %v173, 1
    %v262 = vunpack.c.l.b16 %v141
    %v263 = vunpack.c.l.b16 %v142
    %v264 = vunpack.c.l.b16 %v143
    %v265 = vunpack.c.l.b16 %v144
    %v266 = vunpack.c.l.b16 %v145
    %v267 = vunpack.c.l.b16 %v146
    %v268 = vunpack.c.l.b16 %v147
    %v269 = vunpack.c.l.b16 %v148
    %v270 = vunpack.c.l.b16 %v149
    %v271 = vunpack.c.l.b16 %v150
    %v272 = vunpack.c.l.b16 %v151
    %v273 = vunpack.c.l.b16 %v152
    %v274 = vunpack.c.l.b16 %v153
    %v275 = vunpack.c.l.b16 %v154
    %v276 = vunpack.c.l.b16 %v155
    %v277 = vunpack.c.l.b16 %v156
    %v278 = vpack.c.b16 %v263, %v262
    %v279 = vpack.c.b16 %v265, %v264
    %v280 = vpack.c.b16 %v267, %v266
    %v281 = vpack.c.b16 %v269, %v268
    %v282 = vpack.c.b16 %v271, %v270
    %v283 = vpack.c.b16 %v273, %v272
    %v284 = vpack.c.b16 %v275, %v274
    %v285 = vpack.c.b16 %v277, %v276
    %294 = vmatpush.bf16.msra.mxu0 %v285
    %295 = vmatpush.bf16.msra.mxu0 %v284
    %296 = vmatpush.bf16.msra.mxu0 %v283
    %297 = vmatpush.bf16.msra.mxu0 %v282
    %298 = vmatpush.bf16.msra.mxu0 %v281
    %299 = vmatpush.bf16.msra.mxu0 %v280
    %300 = vmatpush.bf16.msra.mxu0 %v279
    %301 = vmatpush.bf16.msra.mxu0 %v278
    %302 = vmatmul.bf16.gmra.mxu0 %v244
    %v303 = vpop.f32.mrf.mxu0
    %v304 = vadd.f32 %v245, %v303
    %v305 = vpop.f32.mrf.mxu0
    %v306 = vadd.f32 %v245, %v305
    %307 = vdwg.mxu0
    %308 = vadd.xlane.f32.xlu0 %v304
    %v309 = vpop.xlane.xlu0 %308
    %310 = vadd.xlane.f32.xlu0 %v306
    %v311 = vpop.xlane.xlu0 %310
    %v312 = vmul.f32 %v309, 0.03125
    %v313 = vmul.f32 %v311, 0.03125
    %v314 = vmul.f32 %v304, %v304
    %v315 = vmul.f32 %v306, %v306
    %316 = vadd.xlane.f32.xlu0 %v314
    %v317 = vpop.xlane.xlu0 %316
    %318 = vadd.xlane.f32.xlu0 %v315
    %v319 = vpop.xlane.xlu0 %318
    %v320 = vmul.f32 %v317, 0.03125
    %v321 = vmul.f32 %v319, 0.03125
    %v322 = vmul.f32 %v312, %v312
    %v323 = vmul.f32 %v313, %v313
    %v324 = vsub.f32 %v320, %v322
    %v325 = vsub.f32 %v321, %v323
    %v326 = vadd.f32 %v324, 1e-05
    %v327 = vadd.f32 %v325, 1e-05
    %v328 = vrsqrt.pop %v326
    %v329 = vmul.f32 %v328, %v326
    %v330 = vmul.f32 %v329, %v328
    %v331 = vmul.f32 0.5, %v330
    %v332 = vsub.f32 1.5, %v331
    %v333 = vmul.f32 %v328, %v332
    %vm334 = vweird.f32 %v326
    %vm335 = vweird.f32 %v328
    %vm336 = vmor %vm334, %vm335
    %v337 = vsel %vm336, %v328, %v333
    %v338 = vrsqrt.pop %v327
    %v339 = vmul.f32 %v338, %v327
    %v340 = vmul.f32 %v339, %v338
    %v341 = vmul.f32 0.5, %v340
    %v342 = vsub.f32 1.5, %v341
    %v343 = vmul.f32 %v338, %v342
    %vm344 = vweird.f32 %v327
    %vm345 = vweird.f32 %v338
    %vm346 = vmor %vm344, %vm345
    %v347 = vsel %vm346, %v338, %v343
    %v348 = vsub.f32 %v304, %v312
    %v349 = vsub.f32 %v306, %v313
    %v350 = vperm.slane %v173, 2
    %v351 = vmul.f32 %v337, %v350
    %v352 = vmul.f32 %v347, %v350
    %v353 = vmul.f32 %v348, %v351
    %v354 = vmul.f32 %v349, %v352
    %v355 = vperm.slane %v173, 3
    %v356 = vadd.f32 %v353, %v355
    %v357 = vadd.f32 %v354, %v355
    %v358 = vmax.f32 %v356, 0.0
    %v359 = vmax.f32 %v357, 0.0
    %v360 = vadd.f32 %v240, %v358
    %v361 = vadd.f32 %v242, %v359
    %v362 = vmul.f32 %v360, %v123
    %v363 = vmul.f32 %v361, %v124
    %v364 = vpack.c.bf16 %v363, %v362
    %365 = vmatpush.bf16.msra.mxu0 %v285
    %366 = vmatpush.bf16.msra.mxu0 %v284
    %367 = vmatpush.bf16.msra.mxu0 %v283
    %368 = vmatpush.bf16.msra.mxu0 %v282
    %369 = vmatpush.bf16.msra.mxu0 %v281
    %370 = vmatpush.bf16.msra.mxu0 %v280
    %371 = vmatpush.bf16.msra.mxu0 %v279
    %372 = vmatpush.bf16.msra.mxu0 %v278
    %373 = vmatmul.bf16.gmra.mxu0 %v364
    %v374 = vpop.f32.mrf.mxu0
    %v375 = vadd.f32 %v245, %v374
    %v376 = vpop.f32.mrf.mxu0
    %v377 = vadd.f32 %v245, %v376
    %378 = vdwg.mxu0
    %379 = vadd.xlane.f32.xlu0 %v375
    %v380 = vpop.xlane.xlu0 %379
    %381 = vadd.xlane.f32.xlu0 %v377
    %v382 = vpop.xlane.xlu0 %381
    %v383 = vmul.f32 %v380, 0.03125
    %v384 = vmul.f32 %v382, 0.03125
    %v385 = vmul.f32 %v375, %v375
    %v386 = vmul.f32 %v377, %v377
    %387 = vadd.xlane.f32.xlu0 %v385
    %v388 = vpop.xlane.xlu0 %387
    %389 = vadd.xlane.f32.xlu0 %v386
    %v390 = vpop.xlane.xlu0 %389
    %v391 = vmul.f32 %v388, 0.03125
    %v392 = vmul.f32 %v390, 0.03125
    %v393 = vmul.f32 %v383, %v383
    %v394 = vmul.f32 %v384, %v384
    %v395 = vsub.f32 %v391, %v393
    %v396 = vsub.f32 %v392, %v394
    %v397 = vadd.f32 %v395, 1e-05
    %v398 = vadd.f32 %v396, 1e-05
    %v399 = vrsqrt.pop %v397
    %v400 = vmul.f32 %v399, %v397
    %v401 = vmul.f32 %v400, %v399
    %v402 = vmul.f32 0.5, %v401
    %v403 = vsub.f32 1.5, %v402
    %v404 = vmul.f32 %v399, %v403
    %vm405 = vweird.f32 %v397
    %vm406 = vweird.f32 %v399
    %vm407 = vmor %vm405, %vm406
    %v408 = vsel %vm407, %v399, %v404
    %v409 = vrsqrt.pop %v398
    %v410 = vmul.f32 %v409, %v398
    %v411 = vmul.f32 %v410, %v409
    %v412 = vmul.f32 0.5, %v411
    %v413 = vsub.f32 1.5, %v412
    %v414 = vmul.f32 %v409, %v413
    %vm415 = vweird.f32 %v398
    %vm416 = vweird.f32 %v409
    %vm417 = vmor %vm415, %vm416
    %v418 = vsel %vm417, %v409, %v414
    %v419 = vsub.f32 %v375, %v383
    %v420 = vsub.f32 %v377, %v384
    %v421 = vmul.f32 %v408, %v350
    %v422 = vmul.f32 %v418, %v350
    %v423 = vmul.f32 %v419, %v421
    %v424 = vmul.f32 %v420, %v422
    %v425 = vadd.f32 %v423, %v355
    %v426 = vadd.f32 %v424, %v355
    %v427 = vmax.f32 %v425, 0.0
    %v428 = vmax.f32 %v426, 0.0
    %v429 = vadd.f32 %v362, %v427
    %v430 = vadd.f32 %v363, %v428
    %v431 = vmul.f32 %v429, %v123
    %v432 = vmul.f32 %v430, %v124
    %v433 = vpack.c.bf16 %v432, %v431
    %v435 = vperm.slane %v174, 0
    %v453 = vunpack.c.l.b16 %v157
    %v454 = vunpack.c.l.b16 %v158
    %v455 = vunpack.c.l.b16 %v159
    %v456 = vunpack.c.l.b16 %v160
    %v457 = vunpack.c.l.b16 %v161
    %v458 = vunpack.c.l.b16 %v162
    %v459 = vunpack.c.l.b16 %v163
    %v460 = vunpack.c.l.b16 %v164
    %v461 = vunpack.c.l.b16 %v165
    %v462 = vunpack.c.l.b16 %v166
    %v463 = vunpack.c.l.b16 %v167
    %v464 = vunpack.c.l.b16 %v168
    %v465 = vunpack.c.l.b16 %v169
    %v466 = vunpack.c.l.b16 %v170
    %v467 = vunpack.c.l.b16 %v171
    %v468 = vunpack.c.l.b16 %v172
    %v469 = vpack.c.b16 %v454, %v453
    %v470 = vpack.c.b16 %v456, %v455
    %v471 = vpack.c.b16 %v458, %v457
    %v472 = vpack.c.b16 %v460, %v459
    %v473 = vpack.c.b16 %v462, %v461
    %v474 = vpack.c.b16 %v464, %v463
    %v475 = vpack.c.b16 %v466, %v465
    %v476 = vpack.c.b16 %v468, %v467
    %485 = vmatpush.bf16.msra.mxu0 %v476
    %486 = vmatpush.bf16.msra.mxu0 %v475
    %487 = vmatpush.bf16.msra.mxu0 %v474
    %488 = vmatpush.bf16.msra.mxu0 %v473
    %489 = vmatpush.bf16.msra.mxu0 %v472
    %490 = vmatpush.bf16.msra.mxu0 %v471
    %491 = vmatpush.bf16.msra.mxu0 %v470
    %492 = vmatpush.bf16.msra.mxu0 %v469
    %493 = vmatmul.bf16.gmra.mxu0 %v433
    %v494 = vpop.f32.mrf.mxu0
    %v495 = vadd.f32 %v435, %v494
    %v496 = vpop.f32.mrf.mxu0
    %v497 = vadd.f32 %v435, %v496
    %498 = vdwg.mxu0
    %499 = vst [vmem:[#allocation13] sm:$0xff] %v495
    %500 = vst [vmem:[#allocation13 + $0x8] sm:$0xff] %v497
    // Predicated region
    $region54: #{tpu_custom_call.1} parent=1 // pred_check
      _
    $region55: #{tpu_custom_call.1} parent=1 // pred_check_branch
      %502 = sbr.rel (0) target = $region57
    $region56: #{tpu_custom_call.1} parent=1 // pred_region
      %504 = vsyncadd [#allocation4], 0
      %s505 = sshll.u32 [#allocation13], 4
      %s506 = int_to_ptr.vmem [resolvable:$true] %s505
      %s507 = sshll.u32 %s7, 4
      %s508 = int_to_ptr.hbm [resolvable:$true] %s507
      %513 = dma.vmem_to_hbm [thread:$0]  %s506, 256, %s508, [#allocation4], 128, 128, 8
    $region57: #{tpu_custom_call.1} parent=1 // pred_fallthru
      _
    // Predicated region
    $region58: #{tpu_custom_call.1} parent=1 // pred_check
      _
    $region59: #{tpu_custom_call.1} parent=1 // pred_check_branch
      %515 = sbr.rel (0) target = $region61
    $region60: #{tpu_custom_call.1} parent=1 // pred_region
      %517 = dma.done [#allocation4], 256
    $region61: #{tpu_custom_call.1} parent=1 // pred_fallthru
      _
    %518 = vsyncpa [#allocation3], 1
    %519 = vsyncpa [#allocation6], 1
    %520 = vsyncpa [#allocation9], 1
    %521 = vsyncpa [#allocation12], 1
    %522 = vsyncpa [#allocation4], 1

</llo_original>
